<compile_context>
chip_gen: v7x
topology: tpu7x:2x2x1
jax: 0.10.0
libtpu: 0.0.40
codegen_flags: <defaults>
</compile_context>

<pallas_src>
import jax
import jax.numpy as jnp
from jax.experimental import pallas as pl
from jax.experimental.pallas import tpu as pltpu

FOCAL_LENGTH = 5000.0


def transform_mat(R, t):
    """[[R, t], [0, 0, 0, 1]] — same as smplx.lbs.transform_mat.  R:(B,3,3), t:(B,3,1)."""
    B = R.shape[0]
    Rt = jnp.concatenate([R, t], axis=2)                                   # (B,3,4)
    bottom = jnp.tile(jnp.array([[[0.0, 0.0, 0.0, 1.0]]], R.dtype), (B, 1, 1))
    return jnp.concatenate([Rt, bottom], axis=1)                           # (B,4,4)


def _camera_kernel(cam_ref, pts_ref, out_ref):
    # cam_ref: (B, 16) f32 in SMEM:
    #          [r00 r01 r02 r10 r11 r12 r20 r21 r22 tx ty tz fx fy cx cy]
    # pts_ref: (1, 3, TN)  lane-dense points tile (rows = x, y, z)
    # out_ref: (1, 2, TN)  lane-dense image points tile (rows = u, v)
    b = pl.program_id(0)

    pts = pts_ref[0]                                   # (3, TN)
    x = pts[0:1, :]                                    # (1, TN)
    y = pts[1:2, :]
    z = pts[2:3, :]

    r00 = cam_ref[b, 0]; r01 = cam_ref[b, 1]; r02 = cam_ref[b, 2]
    r10 = cam_ref[b, 3]; r11 = cam_ref[b, 4]; r12 = cam_ref[b, 5]
    r20 = cam_ref[b, 6]; r21 = cam_ref[b, 7]; r22 = cam_ref[b, 8]
    tx = cam_ref[b, 9]; ty = cam_ref[b, 10]; tz = cam_ref[b, 11]
    fx = cam_ref[b, 12]; fy = cam_ref[b, 13]
    cx = cam_ref[b, 14]; cy = cam_ref[b, 15]

    # Camera-frame coordinates: p_cam = R @ p + t (9 scalar-broadcast FMAs, VPU).
    xc = r00 * x + r01 * y + r02 * z + tx
    yc = r10 * x + r11 * y + r12 * z + ty
    zc = r20 * x + r21 * y + r22 * z + tz

    # Perspective divide + intrinsics, fused: u = xc * (fx / zc) + cx.
    # approx=False keeps full f32 precision (matches the torch.div reference).
    inv_z = pl.reciprocal(zc, approx=False)
    u = xc * (fx * inv_z) + cx                         # (1, TN)
    v = yc * (fy * inv_z) + cy                         # (1, TN)

    out_ref[0] = jnp.concatenate([u, v], axis=0).astype(out_ref.dtype)


def perspective_camera_forward(points, rotation, translation,
                               focal_length_x, focal_length_y, center,
                               *, tile_n=512):
    B, N, _ = points.shape
    tile_n = min(tile_n, N)
    assert N % tile_n == 0, "N must be a multiple of tile_n"
    assert tile_n % 128 == 0 or tile_n == N, "tile_n must be lane-aligned"

    # Glue (parameter packing / layout transposes) stays in plain JAX.
    pts_t = jnp.swapaxes(points, 1, 2)                                     # (B, 3, N)
    cam = jnp.concatenate(
        [rotation.reshape(B, 9),                                           # r00..r22
         translation,                                                      # tx ty tz
         focal_length_x[:, None], focal_length_y[:, None],                 # fx fy
         center],                                                          # cx cy
        axis=1).astype(jnp.float32)                                        # (B, 16)

    grid = (B, N // tile_n)
    out_t = pl.pallas_call(
        _camera_kernel,
        out_shape=jax.ShapeDtypeStruct((B, 2, N), points.dtype),
        grid_spec=pltpu.PrefetchScalarGridSpec(
            num_scalar_prefetch=1,                                         # cam -> SMEM
            grid=grid,
            in_specs=[
                pl.BlockSpec((1, 3, tile_n), lambda b, n, cam: (b, 0, n)),
            ],
            out_specs=pl.BlockSpec((1, 2, tile_n), lambda b, n, cam: (b, 0, n)),
        ),
        compiler_params=pltpu.CompilerParams(
            dimension_semantics=("parallel", "parallel")),
    )(cam, pts_t)

    return jnp.swapaxes(out_t, 1, 2)                                       # (B, N, 2)


def _reference(points, rotation, translation, fx, fy, center):
    """Pure-JAX transcription of PerspectiveCamera.forward for verification."""
    B = points.shape[0]
    cam_mat = jnp.zeros((B, 2, 2), points.dtype)
    cam_mat = cam_mat.at[:, 0, 0].set(fx).at[:, 1, 1].set(fy)
    camt = transform_mat(rotation, translation[..., None])
    ones = jnp.ones(points.shape[:-1] + (1,), points.dtype)
    ph = jnp.concatenate([points, ones], axis=-1)
    proj = jnp.einsum('bki,bji->bjk', camt, ph)
    img = proj[:, :, :2] / proj[:, :, 2:3]
    img = jnp.einsum('bki,bji->bjk', cam_mat, img) + center[:, None, :]
    return img


if __name__ == "__main__":
    B, N = 2, 1024
    key = jax.random.PRNGKey(0)
    k_pts, _, _ = jax.random.split(key, 3)

    points = jax.random.normal(k_pts, (B, N, 3), jnp.float32)

    # Deterministic parameter init (module defaults, lightly perturbed so the
    # math is non-trivial; translation z offset keeps depth away from zero).
    ang = jnp.float32(0.1)
    rot_z = jnp.array([[jnp.cos(ang), -jnp.sin(ang), 0.0],
                       [jnp.sin(ang),  jnp.cos(ang), 0.0],
                       [0.0,           0.0,          1.0]], jnp.float32)
    rotation = jnp.tile(rot_z[None], (B, 1, 1))                            # (B,3,3)
    translation = jnp.tile(jnp.array([[0.05, -0.02, 5.0]], jnp.float32), (B, 1))
    focal_length_x = jnp.full((B,), FOCAL_LENGTH, jnp.float32)
    focal_length_y = jnp.full((B,), FOCAL_LENGTH, jnp.float32)
    center = jnp.tile(jnp.array([[112.0, 112.0]], jnp.float32), (B, 1))

    out = perspective_camera_forward(points, rotation, translation,
                                     focal_length_x, focal_length_y, center)
    out = jax.block_until_ready(out)

    ref = _reference(points, rotation, translation,
                     focal_length_x, focal_length_y, center)
    assert out.shape == (B, N, 2)
    assert jnp.allclose(out, ref, rtol=1e-4, atol=1e-3), \
        f"max abs err {jnp.max(jnp.abs(out - ref))}"
    print("KERNEL_OK")
</pallas_src>

<mosaic_0001>
module attributes {stable_mosaic.version = 11 : i64} {
  func.func @_camera_kernel(%arg0: i32, %arg1: i32, %arg2: memref<2x16xf32, #tpu.memory_space<smem>>, %arg3: memref<1x3x512xf32, #tpu.memory_space<vmem>>, %arg4: memref<1x2x512xf32, #tpu.memory_space<vmem>>) attributes {dimension_semantics = [#tpu.dimension_semantics<parallel>, #tpu.dimension_semantics<parallel>], iteration_bounds = array<i64: 2, 2>, scalar_prefetch = 1 : i64, scratch_operands = 0 : i64, tpu.core_type = #tpu.core_type<tc>, window_params = [{transform_indices = @transform_0, window_bounds = array<i64: 1, 3, 512>}, {transform_indices = @transform_1, window_bounds = array<i64: 1, 2, 512>}]} {
    %c0 = arith.constant 0 : index
    %c0_0 = arith.constant 0 : index
    %c0_1 = arith.constant 0 : index
    %0 = vector.load %arg3[%c0, %c0_0, %c0_1] : memref<1x3x512xf32, #tpu.memory_space<vmem>>, vector<1x3x512xf32>
    %1 = vector.shape_cast %0 : vector<1x3x512xf32> to vector<3x512xf32>
    %2 = vector.extract_strided_slice %1 {offsets = [0, 0], sizes = [1, 512], strides = [1, 1]} : vector<3x512xf32> to vector<1x512xf32>
    %3 = vector.extract_strided_slice %1 {offsets = [1, 0], sizes = [1, 512], strides = [1, 1]} : vector<3x512xf32> to vector<1x512xf32>
    %4 = vector.extract_strided_slice %1 {offsets = [2, 0], sizes = [1, 512], strides = [1, 1]} : vector<3x512xf32> to vector<1x512xf32>
    %5 = arith.index_cast %arg0 : i32 to index
    %c0_2 = arith.constant 0 : index
    %6 = memref.load %arg2[%5, %c0_2] : memref<2x16xf32, #tpu.memory_space<smem>>
    %7 = arith.index_cast %arg0 : i32 to index
    %c1 = arith.constant 1 : index
    %8 = memref.load %arg2[%7, %c1] : memref<2x16xf32, #tpu.memory_space<smem>>
    %9 = arith.index_cast %arg0 : i32 to index
    %c2 = arith.constant 2 : index
    %10 = memref.load %arg2[%9, %c2] : memref<2x16xf32, #tpu.memory_space<smem>>
    %11 = arith.index_cast %arg0 : i32 to index
    %c3 = arith.constant 3 : index
    %12 = memref.load %arg2[%11, %c3] : memref<2x16xf32, #tpu.memory_space<smem>>
    %13 = arith.index_cast %arg0 : i32 to index
    %c4 = arith.constant 4 : index
    %14 = memref.load %arg2[%13, %c4] : memref<2x16xf32, #tpu.memory_space<smem>>
    %15 = arith.index_cast %arg0 : i32 to index
    %c5 = arith.constant 5 : index
    %16 = memref.load %arg2[%15, %c5] : memref<2x16xf32, #tpu.memory_space<smem>>
    %17 = arith.index_cast %arg0 : i32 to index
    %c6 = arith.constant 6 : index
    %18 = memref.load %arg2[%17, %c6] : memref<2x16xf32, #tpu.memory_space<smem>>
    %19 = arith.index_cast %arg0 : i32 to index
    %c7 = arith.constant 7 : index
    %20 = memref.load %arg2[%19, %c7] : memref<2x16xf32, #tpu.memory_space<smem>>
    %21 = arith.index_cast %arg0 : i32 to index
    %c8 = arith.constant 8 : index
    %22 = memref.load %arg2[%21, %c8] : memref<2x16xf32, #tpu.memory_space<smem>>
    %23 = arith.index_cast %arg0 : i32 to index
    %c9 = arith.constant 9 : index
    %24 = memref.load %arg2[%23, %c9] : memref<2x16xf32, #tpu.memory_space<smem>>
    %25 = arith.index_cast %arg0 : i32 to index
    %c10 = arith.constant 10 : index
    %26 = memref.load %arg2[%25, %c10] : memref<2x16xf32, #tpu.memory_space<smem>>
    %27 = arith.index_cast %arg0 : i32 to index
    %c11 = arith.constant 11 : index
    %28 = memref.load %arg2[%27, %c11] : memref<2x16xf32, #tpu.memory_space<smem>>
    %29 = arith.index_cast %arg0 : i32 to index
    %c12 = arith.constant 12 : index
    %30 = memref.load %arg2[%29, %c12] : memref<2x16xf32, #tpu.memory_space<smem>>
    %31 = arith.index_cast %arg0 : i32 to index
    %c13 = arith.constant 13 : index
    %32 = memref.load %arg2[%31, %c13] : memref<2x16xf32, #tpu.memory_space<smem>>
    %33 = arith.index_cast %arg0 : i32 to index
    %c14 = arith.constant 14 : index
    %34 = memref.load %arg2[%33, %c14] : memref<2x16xf32, #tpu.memory_space<smem>>
    %35 = arith.index_cast %arg0 : i32 to index
    %c15 = arith.constant 15 : index
    %36 = memref.load %arg2[%35, %c15] : memref<2x16xf32, #tpu.memory_space<smem>>
    %37 = vector.broadcast %6 : f32 to vector<1x512xf32>
    %38 = arith.mulf %37, %2 : vector<1x512xf32>
    %39 = vector.broadcast %8 : f32 to vector<1x512xf32>
    %40 = arith.mulf %39, %3 : vector<1x512xf32>
    %41 = arith.addf %38, %40 : vector<1x512xf32>
    %42 = vector.broadcast %10 : f32 to vector<1x512xf32>
    %43 = arith.mulf %42, %4 : vector<1x512xf32>
    %44 = arith.addf %41, %43 : vector<1x512xf32>
    %45 = vector.broadcast %24 : f32 to vector<1x512xf32>
    %46 = arith.addf %44, %45 : vector<1x512xf32>
    %47 = vector.broadcast %12 : f32 to vector<1x512xf32>
    %48 = arith.mulf %47, %2 : vector<1x512xf32>
    %49 = vector.broadcast %14 : f32 to vector<1x512xf32>
    %50 = arith.mulf %49, %3 : vector<1x512xf32>
    %51 = arith.addf %48, %50 : vector<1x512xf32>
    %52 = vector.broadcast %16 : f32 to vector<1x512xf32>
    %53 = arith.mulf %52, %4 : vector<1x512xf32>
    %54 = arith.addf %51, %53 : vector<1x512xf32>
    %55 = vector.broadcast %26 : f32 to vector<1x512xf32>
    %56 = arith.addf %54, %55 : vector<1x512xf32>
    %57 = vector.broadcast %18 : f32 to vector<1x512xf32>
    %58 = arith.mulf %57, %2 : vector<1x512xf32>
    %59 = vector.broadcast %20 : f32 to vector<1x512xf32>
    %60 = arith.mulf %59, %3 : vector<1x512xf32>
    %61 = arith.addf %58, %60 : vector<1x512xf32>
    %62 = vector.broadcast %22 : f32 to vector<1x512xf32>
    %63 = arith.mulf %62, %4 : vector<1x512xf32>
    %64 = arith.addf %61, %63 : vector<1x512xf32>
    %65 = vector.broadcast %28 : f32 to vector<1x512xf32>
    %66 = arith.addf %64, %65 : vector<1x512xf32>
    %67 = tpu.reciprocal %66 : vector<1x512xf32> -> vector<1x512xf32>
    %68 = vector.broadcast %30 : f32 to vector<1x512xf32>
    %69 = arith.mulf %68, %67 : vector<1x512xf32>
    %70 = arith.mulf %46, %69 : vector<1x512xf32>
    %71 = vector.broadcast %34 : f32 to vector<1x512xf32>
    %72 = arith.addf %70, %71 : vector<1x512xf32>
    %73 = vector.broadcast %32 : f32 to vector<1x512xf32>
    %74 = arith.mulf %73, %67 : vector<1x512xf32>
    %75 = arith.mulf %56, %74 : vector<1x512xf32>
    %76 = vector.broadcast %36 : f32 to vector<1x512xf32>
    %77 = arith.addf %75, %76 : vector<1x512xf32>
    %78 = tpu.concatenate %72, %77 in 0 : vector<1x512xf32>, vector<1x512xf32> -> vector<2x512xf32>
    %c0_3 = arith.constant 0 : index
    %c0_4 = arith.constant 0 : index
    %c0_5 = arith.constant 0 : index
    %79 = vector.load %arg4[%c0_3, %c0_4, %c0_5] : memref<1x2x512xf32, #tpu.memory_space<vmem>>, vector<1x2x512xf32>
    %80 = vector.shape_cast %79 : vector<1x2x512xf32> to vector<2x512xf32>
    %81 = vector.shape_cast %78 : vector<2x512xf32> to vector<1x2x512xf32>
    tpu.vector_store %arg4[%c0_3, %c0_4, %c0_5], %81 {strides = array<i32>} : memref<1x2x512xf32, #tpu.memory_space<vmem>>, vector<1x2x512xf32>,
    return
  }
  func.func @transform_0(%arg0: i32, %arg1: i32, %arg2: memref<2x16xf32, #tpu.memory_space<smem>>) -> (i32, i32, i32) {
    %c0_i32 = arith.constant 0 : i32
    %c0_i32_0 = arith.constant 0 : i32
    return %arg0, %c0_i32, %arg1 : i32, i32, i32
  }
  func.func @transform_1(%arg0: i32, %arg1: i32, %arg2: memref<2x16xf32, #tpu.memory_space<smem>>) -> (i32, i32, i32) {
    %c0_i32 = arith.constant 0 : i32
    %c0_i32_0 = arith.constant 0 : i32
    return %arg0, %c0_i32, %arg1 : i32, i32, i32
  }
}

</mosaic_0001>

<llo_original>
// kernel: tpu_custom_call.1
$region0: #{tpu_custom_call.1}
  #allocation0 [shape = 'u32[]', space=smem, size = 0x4, offset = 0x4, fixed_abs, tag = 'smem constant byte address 0x4 - core index']
  #allocation1 [shape = 'u32[144,128]{1,0:T(1,128)}', space=vmem, size = 0x12000, scoped, tag = 'internal scratch']
  #allocation2 [shape = 's32[1]{0}', space=sflag, size = 0x4, scoped, tag = 'scoped memory for tpu_custom_call.1']
  #allocation3 [shape = 'u8[1024]{0}', space=smem, size = 0x400, scoped, tag = 'prefetched SMEM operand 0']
  %s0 = inlined_call_operand.vmem [shape: f32[2,16], index: 0, kind: input, shape index: {}]
  %s1 = inlined_call_operand.vmem [shape: f32[2,3,1024], index: 1, kind: input, shape index: {}]
  %s2 = inlined_call_operand.hbm [shape: f32[2,2,1024], index: 2, kind: output, shape index: {}]
  %s3 = sld [smem:[#allocation0]]
  $region37: #{tpu_custom_call.1} parent=0
    _
  %s5 = ssub.s32 1, %s3
  %s6 = scalar_select 0, %s5, %s3
  %s7 = sshll.u32 %s0, 4
  %s8 = int_to_ptr.vmem [resolvable:$true] %s7
  %10 = dma.vmem_to_smem %s8, 32, [#allocation3], [#allocation2]
  %11 = dma.done [#allocation2], 32
  %12 = sfence
  $region1: #{tpu_custom_call.1} parent=0
    #allocation4 [shape = 'u8[8192]{0}', space=vmem, size = 0x2000, scoped, tag = 'output window, operand 0']
    #allocation5 [shape = 's32[2]{0}', space=sflag, size = 0x8, scoped, tag = 'scoped memory for tpu_custom_call.1']
    %13 = vsyncpa [#allocation5], 0
    %s14 = scalar_lea.sflag [#allocation5], 1
    %15 = vsyncpa %s14, 0
    loop: start=0, step=1, limit=6
    $region2: #{tpu_custom_call.1} parent=1 // loop_pre_header
      _
    $region3: #{tpu_custom_call.1} parent=1 // loop_header
      %s17 = sphi 0, %s21
      %p18 = scmp.ge.s32.totalorder %s17, 6
      %s24 = sphi 0, %s36
      %s25 = sphi 0, %s32
      %s26 = sphi 0, %s24
      %s27 = sphi 0, %s25
      %s28 = sphi 0, %s26
      %s29 = sphi 0, %s27
      %s41 = sphi 0, %s43
      %s44 = sphi 0, %s41
      %s45 = sphi 0, %s44
      %s61 = sphi 0, %s45
      %s69 = sphi 0, %s71
      %s72 = sphi 0, %s69
      %s73 = sphi 0, %s72
      %s89 = sphi 0, %s73
    $region4: #{tpu_custom_call.1} parent=1 // loop_header_branch
      %20 = sbr.rel (%p18) target = $region8
    $region5: #{tpu_custom_call.1} parent=1 // loop_body
      %s22 = ssub.s32 %s17, 1
      %s23 = ssub.s32 %s17, 2
      %s30 = sadd.s32 1, %s25
      %p31 = scmp.ge.s32.totalorder %s30, 2
      %s32 = scalar_select %p31, 0, %s30
      %s33 = sadd.s32 1, %s24
      %s34 = scalar_select %p31, %s33, %s24
      %p35 = scmp.ge.s32.totalorder %s34, 2
      %s36 = scalar_select %p35, 0, %s34
      %s37 = ssub.s32 %s24, %s36
      %s38 = ssub.s32 %s25, %s32
      %s39 = sor.u32 %s37, %s38
      %p40 = scmp.eq.s32.totalorder %s39, 0
      %s42 = sadd.s32 %s41, 1
      %s43 = scalar_select %p40, %s41, %s42
      %p46 = pneg %p40
      %p47 = scmp.eq.s32.totalorder %s17, 3
      %p48 = por %p46, %p47
      %p49 = scmp.ne.s32.totalorder %s41, %s44
      %p50 = scmp.eq.s32.totalorder %s17, 0
      %p51 = por %p49, %p50
      %p52 = scmp.ne.s32.totalorder %s41, %s44
      %p53 = scmp.eq.s32.totalorder %s22, 3
      %p54 = por %p52, %p53
      %p55 = scmp.ne.s32.totalorder %s44, %s45
      %p56 = scmp.eq.s32.totalorder %s22, 0
      %p57 = por %p55, %p56
      %p58 = scmp.ne.s32.totalorder %s44, %s45
      %p59 = scmp.eq.s32.totalorder %s23, 3
      %p60 = por %p58, %p59
      %p62 = scmp.ne.s32.totalorder %s45, %s61
      %p63 = scmp.eq.s32.totalorder %s23, 0
      %p64 = por %p62, %p63
      %s65 = ssub.s32 %s24, %s36
      %s66 = ssub.s32 %s25, %s32
      %s67 = sor.u32 %s65, %s66
      %p68 = scmp.eq.s32.totalorder %s67, 0
      %s70 = sadd.s32 %s69, 1
      %s71 = scalar_select %p68, %s69, %s70
      %p74 = pneg %p68
      %p75 = scmp.eq.s32.totalorder %s17, 3
      %p76 = por %p74, %p75
      %p77 = scmp.ne.s32.totalorder %s69, %s72
      %p78 = scmp.eq.s32.totalorder %s17, 0
      %p79 = por %p77, %p78
      %p80 = scmp.ne.s32.totalorder %s69, %s72
      %p81 = scmp.eq.s32.totalorder %s22, 3
      %p82 = por %p80, %p81
      %p83 = scmp.ne.s32.totalorder %s72, %s73
      %p84 = scmp.eq.s32.totalorder %s22, 0
      %p85 = por %p83, %p84
      %p86 = scmp.ne.s32.totalorder %s72, %s73
      %p87 = scmp.eq.s32.totalorder %s23, 3
      %p88 = por %p86, %p87
      %p90 = scmp.ne.s32.totalorder %s73, %s89
      %p91 = scmp.eq.s32.totalorder %s23, 0
      %p92 = por %p90, %p91
      %p93 = scmp.le.s32.totalorder 1, %s17
      %p94 = scmp.lt.s32.totalorder %s17, 5
      %p95 = pnand %p93, %p94
      %p96 = pneg %p95
      // Predicated region
      $region9: #{tpu_custom_call.1} parent=5 // pred_check
        _
      $region10: #{tpu_custom_call.1} parent=5 // pred_check_branch
        %98 = sbr.rel (%p95) target = $region12
      $region11: #{tpu_custom_call.1} parent=5 // pred_region
        %s99 = ssub.s32 %s17, 1
      $region12: #{tpu_custom_call.1} parent=5 // pred_fallthru
        _
      %p100 = scmp.lt.s32.totalorder %s17, 4
      // Predicated region
      $region13: #{tpu_custom_call.1} parent=5 // pred_check
        %p101 = pneg %p100
      $region14: #{tpu_custom_call.1} parent=5 // pred_check_branch
        %103 = sbr.rel (%p101) target = $region16
      $region15: #{tpu_custom_call.1} parent=5 // pred_region
        // Predicated region
        $region17: #{tpu_custom_call.1} parent=15 // pred_check
          %p104 = pneg %p51
        $region18: #{tpu_custom_call.1} parent=15 // pred_check_branch
          %106 = sbr.rel (%p104) target = $region20
        $region19: #{tpu_custom_call.1} parent=15 // pred_region
          %s107 = smul.u32 4, %s25
          %p108 = scmp.lt.s32.totalorder %s24, 1
          %s109 = scalar_select %p108, %s24, 1
          %p110 = scmp.lt.s32.totalorder %s107, 7
          %s111 = scalar_select %p110, %s107, 7
          %s112 = smul.addr %s109, 8
          %s113 = sadd.s32 %s111, %s112
          %s114 = smul.addr %s113, 4
          %s115 = scalar_lea.vmem %s1, %s114
          %s116 = smul.u32 4, %s25
        $region20: #{tpu_custom_call.1} parent=15 // pred_fallthru
          _
      $region16: #{tpu_custom_call.1} parent=5 // pred_fallthru
        _
      %p117 = scmp.le.s32.totalorder 1, %s17
      %p118 = scmp.lt.s32.totalorder %s17, 5
      %p119 = pnand %p117, %p118
      %p120 = pneg %p119
      // Predicated region
      $region21: #{tpu_custom_call.1} parent=5 // pred_check
        _
      $region22: #{tpu_custom_call.1} parent=5 // pred_check_branch
        %122 = sbr.rel (%p119) target = $region24
      $region23: #{tpu_custom_call.1} parent=5 // pred_region
        %s123 = ssub.s32 %s17, 1
        %s124 = smul.u32 4, %s27
        %p125 = scmp.lt.s32.totalorder %s26, 1
        %s126 = scalar_select %p125, %s26, 1
        %p127 = scmp.lt.s32.totalorder %s124, 7
        %s128 = scalar_select %p127, %s124, 7
        %s129 = smul.addr %s126, 8
        %s130 = sadd.s32 %s128, %s129
        %s131 = smul.addr %s130, 4
        %s132 = scalar_lea.vmem %s1, %s131
        %p133 = pneg %p57
        %p134 = pneg %p54
        %p135 = pneg %p85
        %p136 = pneg %p82
        %s137 = sand.u32 %s72, 1
        %s138 = scalar_lea.sflag [#allocation5], %s137
        %s139 = sand.u32 %s72, 1
        %s140 = smul.addr %s139, 8
        %s141 = scalar_lea.vmem [#allocation4], %s140
        %s142 = smul.u32 4, %s27
        %p143 = scmp.lt.s32.totalorder %s26, 1
        %s144 = scalar_select %p143, %s26, 1
        %p145 = scmp.lt.s32.totalorder %s142, 7
        %s146 = scalar_select %p145, %s142, 7
        %s147 = smul.addr %s144, 8
        %s148 = sadd.s32 %s146, %s147
        %s149 = smul.addr %s148, 4
        %s150 = scalar_lea.vmem %s1, %s149
        %s151 = smul.u32 4, %s27
        %s152 = smul.u32 4, %s27
        %v153 = vld [vmem:[%s150] sm:$0x77]
        %v154 = vld [vmem:[%s150 + $0x8] sm:$0x77]
        %s155 = smul.u32 %s26, 128
        %s156 = sld [smem:[#allocation3 + %s155]]
        %s157 = sadd.s32 %s155, 1
        %s158 = sld [smem:[#allocation3 + %s157]]
        %s159 = sadd.s32 %s155, 2
        %s160 = sld [smem:[#allocation3 + %s159]]
        %s161 = sadd.s32 %s155, 3
        %s162 = sld [smem:[#allocation3 + %s161]]
        %s163 = sadd.s32 %s155, 4
        %s164 = sld [smem:[#allocation3 + %s163]]
        %s165 = sadd.s32 %s155, 5
        %s166 = sld [smem:[#allocation3 + %s165]]
        %s167 = sadd.s32 %s155, 6
        %s168 = sld [smem:[#allocation3 + %s167]]
        %s169 = sadd.s32 %s155, 7
        %s170 = sld [smem:[#allocation3 + %s169]]
        %s171 = sadd.s32 %s155, 8
        %s172 = sld [smem:[#allocation3 + %s171]]
        %s173 = sadd.s32 %s155, 9
        %s174 = sld [smem:[#allocation3 + %s173]]
        %s175 = sadd.s32 %s155, 10
        %s176 = sld [smem:[#allocation3 + %s175]]
        %s177 = sadd.s32 %s155, 11
        %s178 = sld [smem:[#allocation3 + %s177]]
        %s179 = sadd.s32 %s155, 12
        %s180 = sld [smem:[#allocation3 + %s179]]
        %s181 = sadd.s32 %s155, 13
        %s182 = sld [smem:[#allocation3 + %s181]]
        %s183 = sadd.s32 %s155, 14
        %s184 = sld [smem:[#allocation3 + %s183]]
        %s185 = sadd.s32 %s155, 15
        %s186 = sld [smem:[#allocation3 + %s185]]
        %v187 = vstv %s156
        %v188 = vmul.f32 %v187, %v153
        %v189 = vmul.f32 %v187, %v154
        %v190 = vstv %s158
        %v191 = vmul.f32 %v190, %v153
        %v192 = vmul.f32 %v190, %v154
        %v195 = vrot.slane %v191, 5
        %v196 = vrot.slane %v195, 4
        %v197 = vrot.slane %v192, 5
        %v198 = vrot.slane %v197, 4
        %v201 = vadd.f32 %v188, %v196
        %v202 = vadd.f32 %v189, %v198
        %v203 = vstv %s160
        %v204 = vmul.f32 %v203, %v153
        %v205 = vmul.f32 %v203, %v154
        %v208 = vrot.slane %v204, 6
        %v209 = vrot.slane %v208, 4
        %v210 = vrot.slane %v205, 6
        %v211 = vrot.slane %v210, 4
        %v214 = vadd.f32 %v201, %v209
        %v215 = vadd.f32 %v202, %v211
        %v216 = vstv %s174
        %v217 = vadd.f32 %v214, %v216
        %v218 = vadd.f32 %v215, %v216
        %v219 = vstv %s162
        %v220 = vmul.f32 %v219, %v153
        %v221 = vmul.f32 %v219, %v154
        %v222 = vstv %s164
        %v223 = vmul.f32 %v222, %v153
        %v224 = vmul.f32 %v222, %v154
        %v227 = vrot.slane %v223, 5
        %v228 = vrot.slane %v227, 4
        %v229 = vrot.slane %v224, 5
        %v230 = vrot.slane %v229, 4
        %v233 = vadd.f32 %v220, %v228
        %v234 = vadd.f32 %v221, %v230
        %v235 = vstv %s166
        %v236 = vmul.f32 %v235, %v153
        %v237 = vmul.f32 %v235, %v154
        %v240 = vrot.slane %v236, 6
        %v241 = vrot.slane %v240, 4
        %v242 = vrot.slane %v237, 6
        %v243 = vrot.slane %v242, 4
        %v246 = vadd.f32 %v233, %v241
        %v247 = vadd.f32 %v234, %v243
        %v248 = vstv %s176
        %v249 = vadd.f32 %v246, %v248
        %v250 = vadd.f32 %v247, %v248
        %v251 = vstv %s168
        %v252 = vmul.f32 %v251, %v153
        %v253 = vmul.f32 %v251, %v154
        %v254 = vstv %s170
        %v255 = vmul.f32 %v254, %v153
        %v256 = vmul.f32 %v254, %v154
        %v259 = vrot.slane %v255, 5
        %v260 = vrot.slane %v259, 4
        %v261 = vrot.slane %v256, 5
        %v262 = vrot.slane %v261, 4
        %v265 = vadd.f32 %v252, %v260
        %v266 = vadd.f32 %v253, %v262
        %v267 = vstv %s172
        %v268 = vmul.f32 %v267, %v153
        %v269 = vmul.f32 %v267, %v154
        %v272 = vrot.slane %v268, 6
        %v273 = vrot.slane %v272, 4
        %v274 = vrot.slane %v269, 6
        %v275 = vrot.slane %v274, 4
        %v278 = vadd.f32 %v265, %v273
        %v279 = vadd.f32 %v266, %v275
        %v280 = vstv %s178
        %v281 = vadd.f32 %v278, %v280
        %v282 = vadd.f32 %v279, %v280
        %v283 = vrcp.pop %v281
        %v284 = vrcp.pop %v282
        %v285 = vstv %s180
        %v286 = vmul.f32 %v285, %v283
        %v287 = vmul.f32 %v285, %v284
        %v288 = vmul.f32 %v217, %v286
        %v289 = vmul.f32 %v218, %v287
        %v290 = vstv %s184
        %v291 = vadd.f32 %v288, %v290
        %v292 = vadd.f32 %v289, %v290
        %v293 = vstv %s182
        %v294 = vmul.f32 %v293, %v283
        %v295 = vmul.f32 %v293, %v284
        %v296 = vmul.f32 %v249, %v294
        %v297 = vmul.f32 %v250, %v295
        %v298 = vstv %s186
        %v299 = vadd.f32 %v296, %v298
        %v300 = vadd.f32 %v297, %v298
        %v303 = vlaneseq
        %v304 = vshrl.u32 %v303, 7
        %v305 = vsub.s32 0, %v304
        %v306 = vrot.slane %v291, %v305
        %v307 = vlaneseq
        %v308 = vshrl.u32 %v307, 7
        %v309 = vsub.s32 4, %v308
        %v310 = vrot.slane %v291, %v309
        %v311 = vlaneseq
        %v312 = vshrl.u32 %v311, 7
        %v313 = vsub.s32 0, %v312
        %v314 = vrot.slane %v292, %v313
        %v315 = vlaneseq
        %v316 = vshrl.u32 %v315, 7
        %v317 = vsub.s32 4, %v316
        %v318 = vrot.slane %v292, %v317
        %v325 = vlaneseq
        %v326 = vshrl.u32 %v325, 7
        %v327 = vsub.s32 0, %v326
        %v328 = vrot.slane %v299, %v327
        %v329 = vlaneseq
        %v330 = vshrl.u32 %v329, 7
        %v331 = vsub.s32 4, %v330
        %v332 = vrot.slane %v299, %v331
        %v333 = vlaneseq
        %v334 = vshrl.u32 %v333, 7
        %v335 = vsub.s32 0, %v334
        %v336 = vrot.slane %v300, %v335
        %v337 = vlaneseq
        %v338 = vshrl.u32 %v337, 7
        %v339 = vsub.s32 4, %v338
        %v340 = vrot.slane %v300, %v339
        %vm345 = vcmask 1040384
        %v346 = vsel %vm345, %v306, %v328
        %v347 = vsel %vm345, %v310, %v332
        %v348 = vsel %vm345, %v314, %v336
        %v349 = vsel %vm345, %v318, %v340
        %v354 = vcombine.low %v346, %v347
        %v355 = vcombine.low %v348, %v349
        %v357 = vunpack.c.l.s4 1983009808
        %v358 = vunpack.c.0.s8 %v357
        %v359 = vlaneseq
        %v360 = vshrl.u32 %v359, 7
        %v361 = vsub.s32 %v358, %v360
        %v362 = vrot.slane %v354, %v361
        %v364 = vunpack.c.l.s4 1983009808
        %v365 = vunpack.c.0.s8 %v364
        %v366 = vlaneseq
        %v367 = vshrl.u32 %v366, 7
        %v368 = vsub.s32 %v365, %v367
        %v369 = vrot.slane %v355, %v368
        %v370 = vcombine.low %v362, %v369
        %372 = vst [vmem:[%s141] sm:$0xff] %v370
        %s373 = sand.u32 %s72, 1
        %s374 = scalar_lea.sflag [#allocation5], %s373
        %s375 = sand.u32 %s72, 1
        %s376 = smul.addr %s375, 8
        %s377 = scalar_lea.vmem [#allocation4], %s376
        // Predicated region
        $region25: #{tpu_custom_call.1} parent=23 // pred_check
          %p378 = pneg %p82
        $region26: #{tpu_custom_call.1} parent=23 // pred_check_branch
          %380 = sbr.rel (%p378) target = $region28
        $region27: #{tpu_custom_call.1} parent=23 // pred_region
          %s381 = smul.u32 4, %s27
          %s383 = ssub.s32 128, 128
          %384 = vsyncadd %s374, %s383
          %s385 = smul.addr %s26, 8
          %s386 = sadd.s32 %s381, %s385
          %s387 = smul.addr %s386, 32
          %s388 = scalar_lea.hbm %s2, %s387
          %s390 = sshll.u32 %s377, 4
          %s391 = int_to_ptr.vmem [resolvable:$true] %s390
          %393 = dma.vmem_to_hbm [thread:$0]  %s391, 128, %s388, %s374
        $region28: #{tpu_custom_call.1} parent=23 // pred_fallthru
          _
      $region24: #{tpu_custom_call.1} parent=5 // pred_fallthru
        _
      %p394 = scmp.le.s32.totalorder 2, %s17
      // Predicated region
      $region29: #{tpu_custom_call.1} parent=5 // pred_check
        %p395 = pneg %p394
      $region30: #{tpu_custom_call.1} parent=5 // pred_check_branch
        %397 = sbr.rel (%p395) target = $region32
      $region31: #{tpu_custom_call.1} parent=5 // pred_region
        %s398 = ssub.s32 %s17, 2
        // Predicated region
        $region33: #{tpu_custom_call.1} parent=31 // pred_check
          %p399 = pneg %p88
        $region34: #{tpu_custom_call.1} parent=31 // pred_check_branch
          %401 = sbr.rel (%p399) target = $region36
        $region35: #{tpu_custom_call.1} parent=31 // pred_region
          %s402 = sand.u32 %s73, 1
          %s403 = scalar_lea.sflag [#allocation5], %s402
          %s404 = sand.u32 %s73, 1
          %s405 = smul.addr %s404, 8
          %s406 = scalar_lea.vmem [#allocation4], %s405
          %407 = dma.done %s403, 128
        $region36: #{tpu_custom_call.1} parent=31 // pred_fallthru
          _
      $region32: #{tpu_custom_call.1} parent=5 // pred_fallthru
        _
    $region6: #{tpu_custom_call.1} parent=1 // loop_footer
      %s21 = sadd.s32 1, %s17
    $region7: #{tpu_custom_call.1} parent=1 // loop_footer_branch
      %16 = sbr.rel target = $region3
    $region8: #{tpu_custom_call.1} parent=1 // loop_exit
      _
    %408 = vsyncpa [#allocation5], 1
    %s409 = scalar_lea.sflag [#allocation5], 1
    %410 = vsyncpa %s409, 1

</llo_original>
